<compile_context>
chip_gen: v5e
topology: v5e:2x2
jax: 0.10.0
libtpu: 0.0.40
codegen_flags: <defaults>
</compile_context>

<pallas_src>
import functools

import jax
import jax.numpy as jnp
from jax import lax
from jax.experimental import pallas as pl
from jax.experimental.pallas import tpu as pltpu


def _round_up(x, m):
    return -(-x // m) * m


def _coordconv_kernel(x_ref, w_ref, cb_ref, o_ref, *, KH, KW, W, HW):
    """One image per grid step; the whole conv is a single lane-dense MXU matmul.

    x_ref : (1, Cp, HWp)      zero-padded image, spatial flattened on the lane axis
    w_ref : (Cout, KH*KW*Cp)  conv weight for the real input channels (im2col layout)
    cb_ref: (Cout, HW)        precomputed coord-channel conv contribution + bias
    o_ref : (1, Cout, HW)     full-grid output (VALID crop done by the wrapper)
    """
    x = x_ref[0].astype(jnp.float32)                              # (Cp, HWp)
    # im2col: stack the KH*KW shifted views along the sublane axis.  Each view is a
    # static lane slice; Cp is a multiple of 8 and HW a multiple of 128, so every
    # concatenated piece is tile-aligned.
    taps = [x[:, kh * W + kw: kh * W + kw + HW]                   # (Cp, HW)
            for kh in range(KH) for kw in range(KW)]
    stacked = jnp.concatenate(taps, axis=0)                       # (KH*KW*Cp, HW)
    out = jnp.dot(w_ref[...].astype(jnp.float32), stacked,
                  preferred_element_type=jnp.float32)             # (Cout, HW)
    o_ref[0] = (out + cb_ref[...]).astype(o_ref.dtype)


def coordconv360(x_nchw, weight_oihw, bias, *, with_r: bool = False):
    """x_nchw: (B, Cin, H, W); weight_oihw: (Cout, Cin+2(+1), KH, KW); bias: (Cout,)."""
    B, Cin, H, W = x_nchw.shape
    Cout, Cin_aug, KH, KW = weight_oihw.shape
    n_coord = 2 + (1 if with_r else 0)
    assert Cin_aug == Cin + n_coord
    Ho, Wo = H - KH + 1, W - KW + 1
    HW = H * W
    Cp = _round_up(Cin, 8)                                        # sublane-aligned channels
    HWp = _round_up(HW + (KH - 1) * W + (KW - 1), 128)            # room for shifted views

    f32 = jnp.float32

    # ---- batch-invariant coordinate channels: fold their conv output into the bias ----
    # Same convention as the PyTorch module: xx varies along H (=x_dim), yy along W (=y_dim).
    # NOTE: divides by (dim-1), exactly like the original module (undefined for dim==1).
    xx = (jnp.arange(H, dtype=f32) / (H - 1)) * 2.0 - 1.0
    yy = (jnp.arange(W, dtype=f32) / (W - 1)) * 2.0 - 1.0
    xxc = jnp.broadcast_to(xx[:, None], (H, W))
    yyc = jnp.broadcast_to(yy[None, :], (H, W))
    coord_chans = [xxc, yyc]
    if with_r:
        # TODO(synk): with_r path follows the module formula but is not exercised below.
        coord_chans.append(jnp.sqrt((xxc - 0.5) ** 2 + (yyc - 0.5) ** 2))
    coords = jnp.stack(coord_chans, axis=0)[None]                 # (1, n_coord, H, W)
    coord_out = lax.conv_general_dilated(
        coords, weight_oihw[:, Cin:].astype(f32), (1, 1), "VALID",
        dimension_numbers=("NCHW", "OIHW", "NCHW"))[0]            # (Cout, Ho, Wo)
    cb = jnp.pad(coord_out, ((0, 0), (0, H - Ho), (0, W - Wo)))   # (Cout, H, W)
    cb = (cb + bias.astype(f32)[:, None, None]).reshape(Cout, HW)

    # ---- weight for the real input channels, im2col layout (Cout, KH*KW*Cp) ----
    w_in = jnp.pad(weight_oihw[:, :Cin].astype(f32),
                   ((0, 0), (0, Cp - Cin), (0, 0), (0, 0)))       # (Cout, Cp, KH, KW)
    w_mat = jnp.transpose(w_in, (0, 2, 3, 1)).reshape(Cout, KH * KW * Cp)

    # ---- input: keep NCHW, flatten spatial onto lanes, pad channels/lanes ----
    x_flat = x_nchw.reshape(B, Cin, HW).astype(f32)
    x_pad = jnp.pad(x_flat, ((0, 0), (0, Cp - Cin), (0, HWp - HW)))

    out_flat = pl.pallas_call(
        functools.partial(_coordconv_kernel, KH=KH, KW=KW, W=W, HW=HW),
        out_shape=jax.ShapeDtypeStruct((B, Cout, HW), x_nchw.dtype),
        grid=(B,),
        in_specs=[
            pl.BlockSpec((1, Cp, HWp), lambda b: (b, 0, 0)),
            pl.BlockSpec((Cout, KH * KW * Cp), lambda b: (0, 0)),
            pl.BlockSpec((Cout, HW), lambda b: (0, 0)),
        ],
        out_specs=pl.BlockSpec((1, Cout, HW), lambda b: (b, 0, 0)),
        compiler_params=pltpu.CompilerParams(
            dimension_semantics=("parallel",)),
    )(x_pad, w_mat, cb)

    # Free reshape back to NCHW + cheap VALID crop (no output transpose needed).
    return out_flat.reshape(B, Cout, H, W)[:, :, :Ho, :Wo]


def _reference(x_nchw, weight_oihw, bias, *, with_r: bool = False):
    """Pure-JAX reference matching the PyTorch forward exactly (NCHW)."""
    B, _C, H, W = x_nchw.shape
    xxv = (jnp.arange(H, dtype=jnp.float32) / (H - 1)) * 2.0 - 1.0
    yyv = (jnp.arange(W, dtype=jnp.float32) / (W - 1)) * 2.0 - 1.0
    xxc = jnp.broadcast_to(xxv[None, None, :, None], (B, 1, H, W))
    yyc = jnp.broadcast_to(yyv[None, None, None, :], (B, 1, H, W))
    chans = [x_nchw.astype(jnp.float32), xxc, yyc]
    if with_r:
        chans.append(jnp.sqrt((xxc - 0.5) ** 2 + (yyc - 0.5) ** 2))
    aug = jnp.concatenate(chans, axis=1)
    out = lax.conv_general_dilated(
        aug, weight_oihw.astype(jnp.float32), window_strides=(1, 1), padding="VALID",
        dimension_numbers=("NCHW", "OIHW", "NCHW"))
    return out + bias[None, :, None, None]


if __name__ == "__main__":
    key = jax.random.PRNGKey(0)
    k_x, k_w, k_b = jax.random.split(key, 3)

    # Module config: x_dim=16, y_dim=16, with_r=False, in_channels=4,
    #                out_channels=8, kernel_size=3 (stride=1, padding=0).
    B, Cin, H, W = 2, 4, 16, 16
    Cout, K = 8, 3
    with_r = False
    Cin_aug = Cin + 2 + (1 if with_r else 0)

    x = jax.random.normal(k_x, (B, Cin, H, W), dtype=jnp.float32)
    weight = jax.random.normal(k_w, (Cout, Cin_aug, K, K), dtype=jnp.float32) * 0.1
    bias = jax.random.normal(k_b, (Cout,), dtype=jnp.float32) * 0.1

    out = coordconv360(x, weight, bias, with_r=with_r)
    out = jax.block_until_ready(out)

    ref = _reference(x, weight, bias, with_r=with_r)
    assert out.shape == (B, Cout, H - K + 1, W - K + 1), out.shape
    assert jnp.allclose(out, ref, rtol=1e-4, atol=5e-4), \
        float(jnp.max(jnp.abs(out - ref)))

    print("KERNEL_OK")
</pallas_src>

<mosaic_0001>
module attributes {stable_mosaic.version = 11 : i64} {
  func.func @_coordconv_kernel(%arg0: i32, %arg1: memref<1x8x384xf32, #tpu.memory_space<vmem>>, %arg2: memref<8x72xf32, #tpu.memory_space<vmem>>, %arg3: memref<8x256xf32, #tpu.memory_space<vmem>>, %arg4: memref<1x8x256xf32, #tpu.memory_space<vmem>>) attributes {dimension_semantics = [#tpu.dimension_semantics<parallel>], iteration_bounds = array<i64: 2>, scalar_prefetch = 0 : i64, scratch_operands = 0 : i64, tpu.core_type = #tpu.core_type<tc>, window_params = [{transform_indices = @transform_0, window_bounds = array<i64: 1, 8, 384>}, {pipeline_mode = #tpu.pipeline_mode<synchronous>, transform_indices = @transform_1, window_bounds = array<i64: 8, 72>}, {pipeline_mode = #tpu.pipeline_mode<synchronous>, transform_indices = @transform_2, window_bounds = array<i64: 8, 256>}, {transform_indices = @transform_3, window_bounds = array<i64: 1, 8, 256>}]} {
    %c0 = arith.constant 0 : index
    %c0_0 = arith.constant 0 : index
    %c0_1 = arith.constant 0 : index
    %0 = vector.load %arg1[%c0, %c0_0, %c0_1] : memref<1x8x384xf32, #tpu.memory_space<vmem>>, vector<1x8x384xf32>
    %1 = vector.shape_cast %0 : vector<1x8x384xf32> to vector<8x384xf32>
    %2 = vector.extract_strided_slice %1 {offsets = [0, 0], sizes = [8, 256], strides = [1, 1]} : vector<8x384xf32> to vector<8x256xf32>
    %3 = vector.extract_strided_slice %1 {offsets = [0, 1], sizes = [8, 256], strides = [1, 1]} : vector<8x384xf32> to vector<8x256xf32>
    %4 = vector.extract_strided_slice %1 {offsets = [0, 2], sizes = [8, 256], strides = [1, 1]} : vector<8x384xf32> to vector<8x256xf32>
    %5 = vector.extract_strided_slice %1 {offsets = [0, 16], sizes = [8, 256], strides = [1, 1]} : vector<8x384xf32> to vector<8x256xf32>
    %6 = vector.extract_strided_slice %1 {offsets = [0, 17], sizes = [8, 256], strides = [1, 1]} : vector<8x384xf32> to vector<8x256xf32>
    %7 = vector.extract_strided_slice %1 {offsets = [0, 18], sizes = [8, 256], strides = [1, 1]} : vector<8x384xf32> to vector<8x256xf32>
    %8 = vector.extract_strided_slice %1 {offsets = [0, 32], sizes = [8, 256], strides = [1, 1]} : vector<8x384xf32> to vector<8x256xf32>
    %9 = vector.extract_strided_slice %1 {offsets = [0, 33], sizes = [8, 256], strides = [1, 1]} : vector<8x384xf32> to vector<8x256xf32>
    %10 = vector.extract_strided_slice %1 {offsets = [0, 34], sizes = [8, 256], strides = [1, 1]} : vector<8x384xf32> to vector<8x256xf32>
    %11 = tpu.concatenate %2, %3, %4, %5, %6, %7, %8, %9, %10 in 0 : vector<8x256xf32>, vector<8x256xf32>, vector<8x256xf32>, vector<8x256xf32>, vector<8x256xf32>, vector<8x256xf32>, vector<8x256xf32>, vector<8x256xf32>, vector<8x256xf32> -> vector<72x256xf32>
    %c0_2 = arith.constant 0 : index
    %c0_3 = arith.constant 0 : index
    %12 = vector.load %arg2[%c0_2, %c0_3] : memref<8x72xf32, #tpu.memory_space<vmem>>, vector<8x72xf32>
    %cst = arith.constant dense<0.000000e+00> : vector<8x256xf32>
    %13 = tpu.matmul %12, %11, %cst {dimension_numbers = #tpu.dot_dimension_numbers<[1], [0], [0], [1], [0, 0, 1, 1], [], []>} : vector<8x72xf32>, vector<72x256xf32>, vector<8x256xf32> -> vector<8x256xf32>
    %c0_4 = arith.constant 0 : index
    %c0_5 = arith.constant 0 : index
    %14 = vector.load %arg3[%c0_4, %c0_5] : memref<8x256xf32, #tpu.memory_space<vmem>>, vector<8x256xf32>
    %15 = arith.addf %13, %14 : vector<8x256xf32>
    %c0_6 = arith.constant 0 : index
    %c0_7 = arith.constant 0 : index
    %c0_8 = arith.constant 0 : index
    %16 = vector.load %arg4[%c0_6, %c0_7, %c0_8] : memref<1x8x256xf32, #tpu.memory_space<vmem>>, vector<1x8x256xf32>
    %17 = vector.shape_cast %16 : vector<1x8x256xf32> to vector<8x256xf32>
    %18 = vector.shape_cast %15 : vector<8x256xf32> to vector<1x8x256xf32>
    tpu.vector_store %arg4[%c0_6, %c0_7, %c0_8], %18 {strides = array<i32>} : memref<1x8x256xf32, #tpu.memory_space<vmem>>, vector<1x8x256xf32>,
    return
  }
  func.func @transform_0(%arg0: i32) -> (i32, i32, i32) {
    %c0_i32 = arith.constant 0 : i32
    %c0_i32_0 = arith.constant 0 : i32
    %c0_i32_1 = arith.constant 0 : i32
    return %arg0, %c0_i32, %c0_i32_0 : i32, i32, i32
  }
  func.func @transform_1(%arg0: i32) -> (i32, i32) {
    %c0_i32 = arith.constant 0 : i32
    %c0_i32_0 = arith.constant 0 : i32
    %c0_i32_1 = arith.constant 0 : i32
    return %c0_i32, %c0_i32_0 : i32, i32
  }
  func.func @transform_2(%arg0: i32) -> (i32, i32) {
    %c0_i32 = arith.constant 0 : i32
    %c0_i32_0 = arith.constant 0 : i32
    %c0_i32_1 = arith.constant 0 : i32
    return %c0_i32, %c0_i32_0 : i32, i32
  }
  func.func @transform_3(%arg0: i32) -> (i32, i32, i32) {
    %c0_i32 = arith.constant 0 : i32
    %c0_i32_0 = arith.constant 0 : i32
    %c0_i32_1 = arith.constant 0 : i32
    return %arg0, %c0_i32, %c0_i32_0 : i32, i32, i32
  }
}

</mosaic_0001>

<llo_original>
// kernel: tpu_custom_call.1
$region0: #{tpu_custom_call.1}
  #allocation0 [shape = 'u32[]', space=smem, size = 0x4, offset = 0x4, fixed_abs, tag = 'smem constant byte address 0x4 - core index']
  #allocation1 [shape = 'u32[72,128]{1,0:T(1,128)}', space=vmem, size = 0x9000, scoped, tag = 'internal scratch']
  %s0 = inlined_call_operand.hbm [shape: f32[2,8,384], index: 0, kind: input, shape index: {}]
  %s1 = inlined_call_operand.hbm [shape: f32[8,72], index: 1, kind: input, shape index: {}]
  %s2 = inlined_call_operand.hbm [shape: f32[8,256], index: 2, kind: input, shape index: {}]
  %s3 = inlined_call_operand.hbm [shape: f32[2,8,256], index: 3, kind: output, shape index: {}]
  %s4 = sld [smem:[#allocation0]]
  $region57: #{tpu_custom_call.1} parent=0
    _
  %s6 = ssub.s32 1, %s4
  %s7 = scalar_select 0, %s6, %s4
  $region1: #{tpu_custom_call.1} parent=0
    #allocation2 [shape = 'u8[24576]{0}', space=vmem, size = 0x6000, scoped, tag = 'input window, operand 0']
    #allocation3 [shape = 's32[2]{0}', space=sflag, size = 0x8, scoped, tag = 'scoped memory for tpu_custom_call.1']
    #allocation4 [shape = 's32[2]{0}', space=sflag, size = 0x8, scoped, tag = 'scoped memory for tpu_custom_call.1']
    #allocation5 [shape = 'u8[4096]{0}', space=vmem, size = 0x1000, scoped, tag = 'input window, operand 1, single buffered']
    #allocation6 [shape = 's32[1]{0}', space=sflag, size = 0x4, scoped, tag = 'scoped memory for tpu_custom_call.1']
    #allocation7 [shape = 'u8[8192]{0}', space=vmem, size = 0x2000, scoped, tag = 'input window, operand 2, single buffered']
    #allocation8 [shape = 'u8[16384]{0}', space=vmem, size = 0x4000, scoped, tag = 'output window, operand 0']
    %8 = vsyncpa [#allocation3], 0
    %s9 = scalar_lea.sflag [#allocation3], 1
    %10 = vsyncpa %s9, 0
    %11 = vsyncpa [#allocation6], 0
    %12 = vsyncpa [#allocation4], 0
    %s13 = scalar_lea.sflag [#allocation4], 1
    %14 = vsyncpa %s13, 0
    loop: start=0, step=1, limit=4
    $region2: #{tpu_custom_call.1} parent=1 // loop_pre_header
      _
    $region3: #{tpu_custom_call.1} parent=1 // loop_header
      %s16 = sphi 0, %s20
      %p17 = scmp.ge.s32.totalorder %s16, 4
      %s26 = sphi 0, %s28
      %s29 = sphi 0, %s26
      %s30 = sphi 0, %s29
      %s46 = sphi 0, %s30
      %s50 = sphi 0, %s50
      %s52 = sphi 0, %s50
      %s53 = sphi 0, %s52
      %s67 = sphi 0, %s53
      %s71 = sphi 0, %s71
      %s73 = sphi 0, %s71
      %s74 = sphi 0, %s73
      %s88 = sphi 0, %s74
      %s94 = sphi 0, %s96
      %s97 = sphi 0, %s94
      %s98 = sphi 0, %s97
      %s114 = sphi 0, %s98
    $region4: #{tpu_custom_call.1} parent=1 // loop_header_branch
      %19 = sbr.rel (%p17) target = $region8
    $region5: #{tpu_custom_call.1} parent=1 // loop_body
      %s21 = ssub.s32 %s16, 1
      %s22 = ssub.s32 %s16, 2
      %s23 = sadd.s32 %s16, 1
      %s24 = ssub.s32 %s16, %s23
      %p25 = scmp.eq.s32.totalorder %s24, 0
      %s27 = sadd.s32 %s26, 1
      %s28 = scalar_select %p25, %s26, %s27
      %p31 = pneg %p25
      %p32 = scmp.eq.s32.totalorder %s16, 1
      %p33 = por %p31, %p32
      %p34 = scmp.ne.s32.totalorder %s26, %s29
      %p35 = scmp.eq.s32.totalorder %s16, 0
      %p36 = por %p34, %p35
      %p37 = scmp.ne.s32.totalorder %s26, %s29
      %p38 = scmp.eq.s32.totalorder %s21, 1
      %p39 = por %p37, %p38
      %p40 = scmp.ne.s32.totalorder %s29, %s30
      %p41 = scmp.eq.s32.totalorder %s21, 0
      %p42 = por %p40, %p41
      %p43 = scmp.ne.s32.totalorder %s29, %s30
      %p44 = scmp.eq.s32.totalorder %s22, 1
      %p45 = por %p43, %p44
      %p47 = scmp.ne.s32.totalorder %s30, %s46
      %p48 = scmp.eq.s32.totalorder %s22, 0
      %p49 = por %p47, %p48
      %s51 = sadd.s32 %s50, 1
      %p54 = scmp.eq.s32.totalorder %s16, 1
      %p55 = scmp.ne.s32.totalorder %s50, %s52
      %p56 = scmp.eq.s32.totalorder %s16, 0
      %p57 = por %p55, %p56
      %p58 = scmp.ne.s32.totalorder %s50, %s52
      %p59 = scmp.eq.s32.totalorder %s21, 1
      %p60 = por %p58, %p59
      %p61 = scmp.ne.s32.totalorder %s52, %s53
      %p62 = scmp.eq.s32.totalorder %s21, 0
      %p63 = por %p61, %p62
      %p64 = scmp.ne.s32.totalorder %s52, %s53
      %p65 = scmp.eq.s32.totalorder %s22, 1
      %p66 = por %p64, %p65
      %p68 = scmp.ne.s32.totalorder %s53, %s67
      %p69 = scmp.eq.s32.totalorder %s22, 0
      %p70 = por %p68, %p69
      %s72 = sadd.s32 %s71, 1
      %p75 = scmp.eq.s32.totalorder %s16, 1
      %p76 = scmp.ne.s32.totalorder %s71, %s73
      %p77 = scmp.eq.s32.totalorder %s16, 0
      %p78 = por %p76, %p77
      %p79 = scmp.ne.s32.totalorder %s71, %s73
      %p80 = scmp.eq.s32.totalorder %s21, 1
      %p81 = por %p79, %p80
      %p82 = scmp.ne.s32.totalorder %s73, %s74
      %p83 = scmp.eq.s32.totalorder %s21, 0
      %p84 = por %p82, %p83
      %p85 = scmp.ne.s32.totalorder %s73, %s74
      %p86 = scmp.eq.s32.totalorder %s22, 1
      %p87 = por %p85, %p86
      %p89 = scmp.ne.s32.totalorder %s74, %s88
      %p90 = scmp.eq.s32.totalorder %s22, 0
      %p91 = por %p89, %p90
      %s92 = ssub.s32 %s16, %s23
      %p93 = scmp.eq.s32.totalorder %s92, 0
      %s95 = sadd.s32 %s94, 1
      %s96 = scalar_select %p93, %s94, %s95
      %p99 = pneg %p93
      %p100 = scmp.eq.s32.totalorder %s16, 1
      %p101 = por %p99, %p100
      %p102 = scmp.ne.s32.totalorder %s94, %s97
      %p103 = scmp.eq.s32.totalorder %s16, 0
      %p104 = por %p102, %p103
      %p105 = scmp.ne.s32.totalorder %s94, %s97
      %p106 = scmp.eq.s32.totalorder %s21, 1
      %p107 = por %p105, %p106
      %p108 = scmp.ne.s32.totalorder %s97, %s98
      %p109 = scmp.eq.s32.totalorder %s21, 0
      %p110 = por %p108, %p109
      %p111 = scmp.ne.s32.totalorder %s97, %s98
      %p112 = scmp.eq.s32.totalorder %s22, 1
      %p113 = por %p111, %p112
      %p115 = scmp.ne.s32.totalorder %s98, %s114
      %p116 = scmp.eq.s32.totalorder %s22, 0
      %p117 = por %p115, %p116
      %p118 = scmp.le.s32.totalorder 1, %s16
      %p119 = scmp.lt.s32.totalorder %s16, 3
      %p120 = pnand %p118, %p119
      %p121 = pneg %p120
      // Predicated region
      $region9: #{tpu_custom_call.1} parent=5 // pred_check
        _
      $region10: #{tpu_custom_call.1} parent=5 // pred_check_branch
        %123 = sbr.rel (%p120) target = $region12
      $region11: #{tpu_custom_call.1} parent=5 // pred_region
        %s124 = ssub.s32 %s16, 1
        // Predicated region
        $region13: #{tpu_custom_call.1} parent=11 // pred_check
          %p125 = pneg %p63
        $region14: #{tpu_custom_call.1} parent=11 // pred_check_branch
          %127 = sbr.rel (%p125) target = $region16
        $region15: #{tpu_custom_call.1} parent=11 // pred_region
          %129 = vsyncadd [#allocation6], 0
          %s131 = sshll.u32 %s1, 4
          %s132 = int_to_ptr.hbm [resolvable:$true] %s131
          %s133 = sshll.u32 [#allocation5], 4
          %s134 = int_to_ptr.vmem [resolvable:$true] %s133
          %136 = dma.hbm_to_vmem [thread:$0]  %s132, 128, %s134, [#allocation6]
        $region16: #{tpu_custom_call.1} parent=11 // pred_fallthru
          _
        // Predicated region
        $region17: #{tpu_custom_call.1} parent=11 // pred_check
          %p137 = pneg %p84
        $region18: #{tpu_custom_call.1} parent=11 // pred_check_branch
          %139 = sbr.rel (%p137) target = $region20
        $region19: #{tpu_custom_call.1} parent=11 // pred_region
          %141 = vsyncadd [#allocation6], 0
          %s143 = sshll.u32 %s2, 4
          %s144 = int_to_ptr.hbm [resolvable:$true] %s143
          %s145 = sshll.u32 [#allocation7], 4
          %s146 = int_to_ptr.vmem [resolvable:$true] %s145
          %148 = dma.hbm_to_vmem [thread:$0]  %s144, 256, %s146, [#allocation6]
        $region20: #{tpu_custom_call.1} parent=11 // pred_fallthru
          _
      $region12: #{tpu_custom_call.1} parent=5 // pred_fallthru
        _
      %p149 = scmp.lt.s32.totalorder %s16, 2
      // Predicated region
      $region21: #{tpu_custom_call.1} parent=5 // pred_check
        %p150 = pneg %p149
      $region22: #{tpu_custom_call.1} parent=5 // pred_check_branch
        %152 = sbr.rel (%p150) target = $region24
      $region23: #{tpu_custom_call.1} parent=5 // pred_region
        // Predicated region
        $region25: #{tpu_custom_call.1} parent=23 // pred_check
          %p153 = pneg %p36
        $region26: #{tpu_custom_call.1} parent=23 // pred_check_branch
          %155 = sbr.rel (%p153) target = $region28
        $region27: #{tpu_custom_call.1} parent=23 // pred_region
          %s156 = sand.u32 %s26, 1
          %s157 = scalar_lea.sflag [#allocation3], %s156
          %s158 = sand.u32 %s26, 1
          %s159 = smul.addr %s158, 24
          %s160 = scalar_lea.vmem [#allocation2], %s159
          %162 = vsyncadd %s157, 0
          %s163 = smul.addr %s16, 3
          %s164 = smul.addr %s163, 8
          %s165 = scalar_lea.hbm %s0, %s164
          %s167 = sshll.u32 %s165, 4
          %s168 = int_to_ptr.hbm [resolvable:$true] %s167
          %s169 = sshll.u32 %s160, 4
          %s170 = int_to_ptr.vmem [resolvable:$true] %s169
          %172 = dma.hbm_to_vmem [thread:$0]  %s168, 384, %s170, %s157
        $region28: #{tpu_custom_call.1} parent=23 // pred_fallthru
          _
      $region24: #{tpu_custom_call.1} parent=5 // pred_fallthru
        _
      %p173 = scmp.le.s32.totalorder 1, %s16
      %p174 = scmp.lt.s32.totalorder %s16, 3
      %p175 = pnand %p173, %p174
      %p176 = pneg %p175
      // Predicated region
      $region29: #{tpu_custom_call.1} parent=5 // pred_check
        _
      $region30: #{tpu_custom_call.1} parent=5 // pred_check_branch
        %178 = sbr.rel (%p175) target = $region32
      $region31: #{tpu_custom_call.1} parent=5 // pred_region
        %s179 = ssub.s32 %s16, 1
        %s180 = sand.u32 %s29, 1
        %s181 = scalar_lea.sflag [#allocation3], %s180
        %s182 = sand.u32 %s29, 1
        %s183 = smul.addr %s182, 24
        %s184 = scalar_lea.vmem [#allocation2], %s183
        // Predicated region
        $region33: #{tpu_custom_call.1} parent=31 // pred_check
          %p185 = pneg %p42
        $region34: #{tpu_custom_call.1} parent=31 // pred_check_branch
          %187 = sbr.rel (%p185) target = $region36
        $region35: #{tpu_custom_call.1} parent=31 // pred_region
          %189 = dma.done %s181, 384
        $region36: #{tpu_custom_call.1} parent=31 // pred_fallthru
          _
        // Predicated region
        $region37: #{tpu_custom_call.1} parent=31 // pred_check
          %p190 = pneg %p63
        $region38: #{tpu_custom_call.1} parent=31 // pred_check_branch
          %192 = sbr.rel (%p190) target = $region40
        $region39: #{tpu_custom_call.1} parent=31 // pred_region
          %194 = dma.done [#allocation6], 128
        $region40: #{tpu_custom_call.1} parent=31 // pred_fallthru
          _
        // Predicated region
        $region41: #{tpu_custom_call.1} parent=31 // pred_check
          %p195 = pneg %p84
        $region42: #{tpu_custom_call.1} parent=31 // pred_check_branch
          %197 = sbr.rel (%p195) target = $region44
        $region43: #{tpu_custom_call.1} parent=31 // pred_region
          %199 = dma.done [#allocation6], 256
        $region44: #{tpu_custom_call.1} parent=31 // pred_fallthru
          _
        %s200 = sand.u32 %s29, 1
        %s201 = scalar_lea.sflag [#allocation3], %s200
        %s202 = sand.u32 %s29, 1
        %s203 = smul.addr %s202, 24
        %s204 = scalar_lea.vmem [#allocation2], %s203
        %p205 = pneg %p42
        %p206 = pneg %p39
        %p207 = pneg %p63
        %p208 = pneg %p60
        %p209 = pneg %p84
        %p210 = pneg %p81
        %p211 = pneg %p110
        %p212 = pneg %p107
        %s213 = sand.u32 %s97, 1
        %s214 = scalar_lea.sflag [#allocation4], %s213
        %s215 = sand.u32 %s97, 1
        %s216 = smul.addr %s215, 16
        %s217 = scalar_lea.vmem [#allocation8], %s216
        %v218 = vld [vmem:[%s184] sm:$0xff]
        %v219 = vld [vmem:[%s184 + $0x8] sm:$0xff]
        %v220 = vld [vmem:[%s184 + $0x10] sm:$0xff]
        %224 = vrot.lane.b32.xlu0 %v218, 127
        %v225 = vpop.permute.xlu0 %224
        %226 = vrot.lane.b32.xlu0 %v219, 127
        %v227 = vpop.permute.xlu0 %226
        %228 = vrot.lane.b32.xlu0 %v220, 127
        %v229 = vpop.permute.xlu0 %228
        %vm230 = vcmask 1039360
        %v231 = vsel %vm230, %v225, %v227
        %v232 = vsel %vm230, %v227, %v229
        %235 = vrot.lane.b32.xlu0 %v218, 126
        %v236 = vpop.permute.xlu0 %235
        %237 = vrot.lane.b32.xlu0 %v219, 126
        %v238 = vpop.permute.xlu0 %237
        %239 = vrot.lane.b32.xlu0 %v220, 126
        %v240 = vpop.permute.xlu0 %239
        %vm241 = vcmask 1031168
        %v242 = vsel %vm241, %v236, %v238
        %v243 = vsel %vm241, %v238, %v240
        %246 = vrot.lane.b32.xlu0 %v218, 112
        %v247 = vpop.permute.xlu0 %246
        %248 = vrot.lane.b32.xlu0 %v219, 112
        %v249 = vpop.permute.xlu0 %248
        %250 = vrot.lane.b32.xlu0 %v220, 112
        %v251 = vpop.permute.xlu0 %250
        %vm252 = vcmask 916480
        %v253 = vsel %vm252, %v247, %v249
        %v254 = vsel %vm252, %v249, %v251
        %257 = vrot.lane.b32.xlu0 %v218, 111
        %v258 = vpop.permute.xlu0 %257
        %259 = vrot.lane.b32.xlu0 %v219, 111
        %v260 = vpop.permute.xlu0 %259
        %261 = vrot.lane.b32.xlu0 %v220, 111
        %v262 = vpop.permute.xlu0 %261
        %vm263 = vcmask 908288
        %v264 = vsel %vm263, %v258, %v260
        %v265 = vsel %vm263, %v260, %v262
        %268 = vrot.lane.b32.xlu0 %v218, 110
        %v269 = vpop.permute.xlu0 %268
        %270 = vrot.lane.b32.xlu0 %v219, 110
        %v271 = vpop.permute.xlu0 %270
        %272 = vrot.lane.b32.xlu0 %v220, 110
        %v273 = vpop.permute.xlu0 %272
        %vm274 = vcmask 900096
        %v275 = vsel %vm274, %v269, %v271
        %v276 = vsel %vm274, %v271, %v273
        %279 = vrot.lane.b32.xlu0 %v218, 96
        %v280 = vpop.permute.xlu0 %279
        %281 = vrot.lane.b32.xlu0 %v219, 96
        %v282 = vpop.permute.xlu0 %281
        %283 = vrot.lane.b32.xlu0 %v220, 96
        %v284 = vpop.permute.xlu0 %283
        %vm285 = vcmask 785408
        %v286 = vsel %vm285, %v280, %v282
        %v287 = vsel %vm285, %v282, %v284
        %290 = vrot.lane.b32.xlu0 %v218, 95
        %v291 = vpop.permute.xlu0 %290
        %292 = vrot.lane.b32.xlu0 %v219, 95
        %v293 = vpop.permute.xlu0 %292
        %294 = vrot.lane.b32.xlu0 %v220, 95
        %v295 = vpop.permute.xlu0 %294
        %vm296 = vcmask 777216
        %v297 = vsel %vm296, %v291, %v293
        %v298 = vsel %vm296, %v293, %v295
        %301 = vrot.lane.b32.xlu0 %v218, 94
        %v302 = vpop.permute.xlu0 %301
        %303 = vrot.lane.b32.xlu0 %v219, 94
        %v304 = vpop.permute.xlu0 %303
        %305 = vrot.lane.b32.xlu0 %v220, 94
        %v306 = vpop.permute.xlu0 %305
        %vm307 = vcmask 769024
        %v308 = vsel %vm307, %v302, %v304
        %v309 = vsel %vm307, %v304, %v306
        %v312 = vld [vmem:[#allocation5] sm:$0xff]
        %v313 = vld [vmem:[#allocation7] sm:$0xff]
        %v314 = vld [vmem:[#allocation7 + $0x8] sm:$0xff]
        %vm315 = vcmask 588800
        %v317 = vsel %vm315, %v312, 0
        %319 = vmatpush.msra.mxu0 0.0
        %320 = vmatpush.msra.mxu0 0.0
        %321 = vmatpush.msra.mxu0 0.0
        %322 = vmatpush.msra.mxu0 0.0
        %323 = vmatpush.msra.mxu0 0.0
        %324 = vmatpush.msra.mxu0 0.0
        %325 = vmatpush.msra.mxu0 0.0
        %326 = vmatpush.msra.mxu0 %v308
        %327 = vmatpush.msra.mxu0 %v297
        %328 = vmatpush.msra.mxu0 %v286
        %329 = vmatpush.msra.mxu0 %v275
        %330 = vmatpush.msra.mxu0 %v264
        %331 = vmatpush.msra.mxu0 %v253
        %332 = vmatpush.msra.mxu0 %v242
        %333 = vmatpush.msra.mxu0 %v231
        %334 = vmatpush.msra.mxu0 %v218
        %335 = vmatmul.f32.gmra.mxu0 %v317
        %v336 = vpop.f32.mrf.mxu0
        %v337 = vadd.f32 %v313, %v336
        %338 = vdwg.mxu0
        %339 = vmatpush.msra.mxu0 0.0
        %340 = vmatpush.msra.mxu0 0.0
        %341 = vmatpush.msra.mxu0 0.0
        %342 = vmatpush.msra.mxu0 0.0
        %343 = vmatpush.msra.mxu0 0.0
        %344 = vmatpush.msra.mxu0 0.0
        %345 = vmatpush.msra.mxu0 0.0
        %346 = vmatpush.msra.mxu0 %v309
        %347 = vmatpush.msra.mxu0 %v298
        %348 = vmatpush.msra.mxu0 %v287
        %349 = vmatpush.msra.mxu0 %v276
        %350 = vmatpush.msra.mxu0 %v265
        %351 = vmatpush.msra.mxu0 %v254
        %352 = vmatpush.msra.mxu0 %v243
        %353 = vmatpush.msra.mxu0 %v232
        %354 = vmatpush.msra.mxu0 %v219
        %355 = vmatmul.f32.gmra.mxu0 %v317
        %v356 = vpop.f32.mrf.mxu0
        %v357 = vadd.f32 %v314, %v356
        %358 = vdwg.mxu0
        %359 = vst [vmem:[%s217] sm:$0xff] %v337
        %360 = vst [vmem:[%s217 + $0x8] sm:$0xff] %v357
        %s361 = sand.u32 %s97, 1
        %s362 = scalar_lea.sflag [#allocation4], %s361
        %s363 = sand.u32 %s97, 1
        %s364 = smul.addr %s363, 16
        %s365 = scalar_lea.vmem [#allocation8], %s364
        // Predicated region
        $region45: #{tpu_custom_call.1} parent=31 // pred_check
          %p366 = pneg %p107
        $region46: #{tpu_custom_call.1} parent=31 // pred_check_branch
          %368 = sbr.rel (%p366) target = $region48
        $region47: #{tpu_custom_call.1} parent=31 // pred_region
          %370 = vsyncadd %s362, 0
          %s371 = smul.addr %s21, 2
          %s372 = smul.addr %s371, 8
          %s373 = scalar_lea.hbm %s3, %s372
          %s375 = sshll.u32 %s365, 4
          %s376 = int_to_ptr.vmem [resolvable:$true] %s375
          %s377 = sshll.u32 %s373, 4
          %s378 = int_to_ptr.hbm [resolvable:$true] %s377
          %380 = dma.vmem_to_hbm [thread:$0]  %s376, 256, %s378, %s362
        $region48: #{tpu_custom_call.1} parent=31 // pred_fallthru
          _
      $region32: #{tpu_custom_call.1} parent=5 // pred_fallthru
        _
      %p381 = scmp.le.s32.totalorder 2, %s16
      // Predicated region
      $region49: #{tpu_custom_call.1} parent=5 // pred_check
        %p382 = pneg %p381
      $region50: #{tpu_custom_call.1} parent=5 // pred_check_branch
        %384 = sbr.rel (%p382) target = $region52
      $region51: #{tpu_custom_call.1} parent=5 // pred_region
        %s385 = ssub.s32 %s16, 2
        // Predicated region
        $region53: #{tpu_custom_call.1} parent=51 // pred_check
          %p386 = pneg %p113
        $region54: #{tpu_custom_call.1} parent=51 // pred_check_branch
          %388 = sbr.rel (%p386) target = $region56
        $region55: #{tpu_custom_call.1} parent=51 // pred_region
          %s389 = sand.u32 %s98, 1
          %s390 = scalar_lea.sflag [#allocation4], %s389
          %s391 = sand.u32 %s98, 1
          %s392 = smul.addr %s391, 16
          %s393 = scalar_lea.vmem [#allocation8], %s392
          %395 = dma.done %s390, 256
        $region56: #{tpu_custom_call.1} parent=51 // pred_fallthru
          _
      $region52: #{tpu_custom_call.1} parent=5 // pred_fallthru
        _
    $region6: #{tpu_custom_call.1} parent=1 // loop_footer
      %s20 = sadd.s32 1, %s16
    $region7: #{tpu_custom_call.1} parent=1 // loop_footer_branch
      %15 = sbr.rel target = $region3
    $region8: #{tpu_custom_call.1} parent=1 // loop_exit
      _
    %396 = vsyncpa [#allocation3], 1
    %s397 = scalar_lea.sflag [#allocation3], 1
    %398 = vsyncpa %s397, 1
    %399 = vsyncpa [#allocation6], 1
    %400 = vsyncpa [#allocation4], 1
    %s401 = scalar_lea.sflag [#allocation4], 1
    %402 = vsyncpa %s401, 1

</llo_original>
